<compile_context>
chip_gen: v7x
topology: tpu7x:2x2x1
jax: 0.10.0
libtpu: 0.0.40
codegen_flags: <defaults>
</compile_context>

<pallas_src>
import functools

import jax
import jax.numpy as jnp
from jax import lax
from jax.experimental import pallas as pl
from jax.experimental.pallas import tpu as pltpu


def _round_up(x, m):
    return (x + m - 1) // m * m


def _attn_general_kernel(qb_ref, c_ref, enc_ref, out_ref, *, valid_len):
    """One L-tile of the energy computation + final softmax.

    qb_ref:  (B*H, B)    resident block-diagonal query, Qb[b*H+h, b] = (hid@W)[b, h]
    c_ref:   (1, B)      resident bias term c[b] = hid[b] . bias
    enc_ref: (tl, B*H)   current encoder-output tile, NATIVE dtype
    out_ref: (L_pad, B)  resident energy / softmax buffer (written back once)
    """
    li = pl.program_id(0)
    n_l = pl.num_programs(0)
    tl = enc_ref.shape[0]
    l_pad = out_ref.shape[0]

    # Stream in native dtype; all compute in f32.
    enc = enc_ref[...].astype(jnp.float32)                          # (tl, B*H)

    # energy[l, b] = q[b] . enc[l, b, :]  as a single MXU matmul against the
    # block-diagonal query.  Produces a lane-friendly (tl, B) result directly.
    e = jnp.dot(enc, qb_ref[...], preferred_element_type=jnp.float32)
    e = e + c_ref[...]                                              # (tl, B)

    start = li * tl
    if tl % 8 == 0:
        start = pl.multiple_of(start, tl)
    out_ref[pl.ds(start, tl), :] = e

    # Softmax over L (== F.softmax(.., dim=1) on the (B, L) energies), applied
    # once after the whole L axis has been streamed.  The (L_pad, B) buffer is
    # small and resident in VMEM across the grid, so this is numerically the
    # same as a single-shot softmax.
    @pl.when(li == n_l - 1)
    def _():
        ee = out_ref[...]                                           # (L_pad, B)
        if l_pad > valid_len:  # static: mask garbage rows from the boundary tile
            row = lax.broadcasted_iota(jnp.int32, ee.shape, 0)
            ee = jnp.where(row < valid_len, ee, -jnp.inf)
        m = jnp.max(ee, axis=0, keepdims=True)                      # (1, B)
        p = jnp.exp(ee - m)
        inv = pl.reciprocal(jnp.sum(p, axis=0, keepdims=True), approx=False)
        out_ref[...] = p * inv


def _vmem_budgets():
    """(target working-set bytes, scoped vmem_limit_bytes) for this chip."""
    try:
        cap = int(pltpu.get_tpu_info().vmem_capacity_bytes)
    except Exception:
        cap = 64 * 1024 * 1024          # v7x per-TC size: the safe assumption
    # 48 MiB working set on 128 MiB chips (v5e/v6e), 40 MiB on 64 MiB (v7x).
    total = min(48 * 1024 * 1024, (cap * 5) // 8)
    limit = min((cap * 3) // 4, total + 16 * 1024 * 1024)
    return total, limit


def _pick_l_tile(L, lane_width, itemsize, enc_budget_bytes):
    """Largest L-tile (multiple of the sublane granule, or == L) whose padded
    (tl, lane_width) VMEM tile fits the per-buffer budget."""
    sub = max(8, 32 // itemsize)                     # 8 f32 / 16 bf16 / 32 int8
    row_bytes = _round_up(lane_width, 128) * itemsize
    max_rows = max(sub, (enc_budget_bytes // (row_bytes * sub)) * sub)
    if L <= max_rows:
        return L                                     # full dim: always legal
    return max_rows                                  # multiple of sub >= 8


@functools.partial(jax.jit, static_argnames=("l_tile",))
def attn_general(hidden, encoder_outputs, W, bias, l_tile=None):
    """hidden: (1, B, H), encoder_outputs: (L, B, H), W: (H, H) nn.Linear
    weight (out, in), bias: (H,).  Returns attention weights (B, 1, L) f32."""
    L, B, H = encoder_outputs.shape
    hid = hidden[0].astype(jnp.float32)                             # (B, H)

    # Fold the Linear into the query (tiny, jit-fused prologue):
    #   hid . (W e + b) == (hid @ W) . e + hid . b
    q = jnp.dot(hid, W.astype(jnp.float32))                         # (B, H)
    c = jnp.dot(hid, bias.astype(jnp.float32)).reshape(1, B)        # (1, B)
    # Block-diagonal query for the in-kernel MXU matmul: Qb[b*H+h, b] = q[b, h].
    qb = (q[:, :, None] * jnp.eye(B, dtype=jnp.float32)[:, None, :]).reshape(B * H, B)
    # TODO(synk): for single-step decode, fold this prologue into the kernel
    # (resident W/bias, compute q at li==0) to shave the remaining XLA op cost.

    # Free, contiguous view: lane dim becomes B*H instead of H.
    enc2d = encoder_outputs.reshape(L, B * H)                       # native dtype

    total, limit = _vmem_budgets()
    out_est = 2 * _round_up(L + 64, 8) * _round_up(B, 128) * 4      # resident out (x2)
    enc_budget = max(1 << 20, (total - out_est) // 2)               # 2x double-buffered
    limit = min(limit + 0, max(limit, out_est + 2 * enc_budget + (4 << 20)))

    tl = _pick_l_tile(L, B * H, enc2d.dtype.itemsize, enc_budget) if l_tile is None else int(l_tile)
    n_l = -(-L // tl)
    l_pad = n_l * tl

    energies = pl.pallas_call(
        functools.partial(_attn_general_kernel, valid_len=L),
        out_shape=jax.ShapeDtypeStruct((l_pad, B), jnp.float32),
        grid_spec=pltpu.PrefetchScalarGridSpec(
            num_scalar_prefetch=0,
            grid=(n_l,),
            in_specs=[
                pl.BlockSpec((B * H, B), lambda l: (0, 0)),      # qb (resident)
                pl.BlockSpec((1, B), lambda l: (0, 0)),          # c  (resident)
                pl.BlockSpec((tl, B * H), lambda l: (l, 0)),     # enc (streamed, native dtype)
            ],
            out_specs=pl.BlockSpec((l_pad, B), lambda l: (0, 0)),   # resident accumulator
        ),
        compiler_params=pltpu.CompilerParams(
            # Single accumulation axis (softmax finalized at the last step).
            dimension_semantics=("arbitrary",),
            vmem_limit_bytes=limit,
        ),
    )(qb, c, enc2d)
    # TODO(synk): on v7x a second "parallel" grid axis over B-chunks (or an
    # online-softmax L split) would use both TensorCores; skipped here since
    # it only pays off for large B (splitting B=2 just worsens padding).

    w = energies[:L] if l_pad > L else energies                     # (L, B)
    # Only the tiny (L, B) result is transposed; enc is never moved in HBM.
    return jnp.transpose(w)[:, None, :]                             # (B, 1, L)


def _reference(hidden, encoder_outputs, W, bias):
    # Pure-JAX reference mirroring the PyTorch loops.
    enc = jnp.transpose(encoder_outputs, (1, 0, 2)).astype(jnp.float32)  # (B, L, H)
    hid = hidden[0].astype(jnp.float32)                                  # (B, H)
    proj = jnp.einsum('blh,oh->blo', enc, W.astype(jnp.float32)) + bias.astype(jnp.float32)
    energy = jnp.einsum('bh,blh->bl', hid, proj)
    return jax.nn.softmax(energy, axis=1)[:, None, :]


if __name__ == "__main__":
    # Small shapes consistent with the module: seq L=8, batch B=2, hidden H=32.
    L, B, H = 8, 2, 32
    key = jax.random.PRNGKey(0)
    k1, k2, k3, k4 = jax.random.split(key, 4)

    hidden = jax.random.normal(k1, (1, B, H), dtype=jnp.float32)
    encoder_outputs = jax.random.normal(k2, (L, B, H), dtype=jnp.float32)
    # nn.Linear(H, H) parameters, deterministically initialized.
    W = jax.random.normal(k3, (H, H), dtype=jnp.float32) * 0.1
    bias = jax.random.normal(k4, (H,), dtype=jnp.float32) * 0.1

    out = jax.block_until_ready(attn_general(hidden, encoder_outputs, W, bias))
    ref = _reference(hidden, encoder_outputs, W, bias)
    assert out.shape == (B, 1, L)
    assert jnp.allclose(out, ref, atol=1e-5, rtol=1e-5)

    # Exercise the cdiv / masked-tail path (L not a multiple of the tile).
    L2 = 13
    enc2 = jax.random.normal(k2, (L2, B, H), dtype=jnp.float32)
    out2 = jax.block_until_ready(attn_general(hidden, enc2, W, bias, l_tile=8))
    ref2 = _reference(hidden, enc2, W, bias)
    assert out2.shape == (B, 1, L2)
    assert jnp.allclose(out2, ref2, atol=1e-5, rtol=1e-5)

    # TODO(synk): 'concat' scoring method is ill-defined in the original
    # PyTorch (cat along dim=1 of 1-D tensors); only 'dot'/'general' semantics
    # are meaningful — 'general' is implemented here ('dot' is W=I, bias=0).
    print("KERNEL_OK")
</pallas_src>

<mosaic_0001>
module attributes {stable_mosaic.version = 11 : i64} {
  func.func @_attn_general_kernel(%arg0: i32, %arg1: memref<64x2xf32, #tpu.memory_space<vmem>>, %arg2: memref<1x2xf32, #tpu.memory_space<vmem>>, %arg3: memref<8x64xf32, #tpu.memory_space<vmem>>, %arg4: memref<8x2xf32, #tpu.memory_space<vmem>>) attributes {dimension_semantics = [#tpu.dimension_semantics<arbitrary>], iteration_bounds = array<i64: 1>, scalar_prefetch = 0 : i64, scratch_operands = 0 : i64, tpu.core_type = #tpu.core_type<tc>, window_params = [{pipeline_mode = #tpu.pipeline_mode<synchronous>, transform_indices = @transform_0, window_bounds = array<i64: 64, 2>}, {pipeline_mode = #tpu.pipeline_mode<synchronous>, transform_indices = @transform_1, window_bounds = array<i64: 1, 2>}, {transform_indices = @transform_2, window_bounds = array<i64: 8, 64>}, {pipeline_mode = #tpu.pipeline_mode<synchronous>, transform_indices = @transform_3, window_bounds = array<i64: 8, 2>}]} {
    %c0 = arith.constant 0 : index
    %c0_0 = arith.constant 0 : index
    %0 = vector.load %arg3[%c0, %c0_0] : memref<8x64xf32, #tpu.memory_space<vmem>>, vector<8x64xf32>
    %c0_1 = arith.constant 0 : index
    %c0_2 = arith.constant 0 : index
    %1 = vector.load %arg1[%c0_1, %c0_2] : memref<64x2xf32, #tpu.memory_space<vmem>>, vector<64x2xf32>
    %cst = arith.constant dense<0.000000e+00> : vector<8x2xf32>
    %2 = tpu.matmul %0, %1, %cst {dimension_numbers = #tpu.dot_dimension_numbers<[1], [0], [0], [1], [0, 0, 1, 1], [], []>} : vector<8x64xf32>, vector<64x2xf32>, vector<8x2xf32> -> vector<8x2xf32>
    %c0_3 = arith.constant 0 : index
    %c0_4 = arith.constant 0 : index
    %3 = vector.load %arg2[%c0_3, %c0_4] : memref<1x2xf32, #tpu.memory_space<vmem>>, vector<1x2xf32>
    %4 = vector.broadcast %3 : vector<1x2xf32> to vector<8x2xf32>
    %5 = arith.addf %2, %4 : vector<8x2xf32>
    %c8_i32 = arith.constant 8 : i32
    %6 = arith.muli %arg0, %c8_i32 : i32
    %7 = tpu.assume_multiple %6, 8 : i32
    %8 = arith.index_cast %7 : i32 to index
    %c0_5 = arith.constant 0 : index
    %9 = vector.load %arg4[%8, %c0_5] : memref<8x2xf32, #tpu.memory_space<vmem>>, vector<8x2xf32>
    tpu.vector_store %arg4[%8, %c0_5], %5 {strides = array<i32>} : memref<8x2xf32, #tpu.memory_space<vmem>>, vector<8x2xf32>,
    %c0_i32 = arith.constant 0 : i32
    %10 = arith.cmpi eq, %arg0, %c0_i32 : i32
    %11 = arith.extui %10 : i1 to i32
    %c0_i32_6 = arith.constant 0 : i32
    %12 = arith.cmpi ne, %11, %c0_i32_6 : i32
    scf.if %12 {
      %c0_7 = arith.constant 0 : index
      %c0_8 = arith.constant 0 : index
      %13 = vector.load %arg4[%c0_7, %c0_8] : memref<8x2xf32, #tpu.memory_space<vmem>>, vector<8x2xf32>
      %cst_9 = arith.constant dense<0xFF800000> : vector<2xf32>
      %14 = vector.multi_reduction <maximumf>, %13, %cst_9 [0] : vector<8x2xf32> to vector<2xf32>
      %15 = vector.shape_cast %14 : vector<2xf32> to vector<1x2xf32>
      %16 = vector.broadcast %15 : vector<1x2xf32> to vector<8x2xf32>
      %17 = arith.subf %13, %16 : vector<8x2xf32>
      %18 = math.exp %17 : vector<8x2xf32>
      %cst_10 = arith.constant dense<0.000000e+00> : vector<2xf32>
      %19 = vector.multi_reduction <add>, %18, %cst_10 [0] : vector<8x2xf32> to vector<2xf32>
      %20 = vector.shape_cast %19 : vector<2xf32> to vector<1x2xf32>
      %21 = tpu.reciprocal %20 : vector<1x2xf32> -> vector<1x2xf32>
      %22 = vector.broadcast %21 : vector<1x2xf32> to vector<8x2xf32>
      %23 = arith.mulf %18, %22 : vector<8x2xf32>
      %c0_11 = arith.constant 0 : index
      %c0_12 = arith.constant 0 : index
      %24 = vector.load %arg4[%c0_11, %c0_12] : memref<8x2xf32, #tpu.memory_space<vmem>>, vector<8x2xf32>
      tpu.vector_store %arg4[%c0_11, %c0_12], %23 {strides = array<i32>} : memref<8x2xf32, #tpu.memory_space<vmem>>, vector<8x2xf32>,
    } else {
    }
    return
  }
  func.func @transform_0(%arg0: i32) -> (i32, i32) {
    %c0_i32 = arith.constant 0 : i32
    %c0_i32_0 = arith.constant 0 : i32
    %c0_i32_1 = arith.constant 0 : i32
    return %c0_i32, %c0_i32_0 : i32, i32
  }
  func.func @transform_1(%arg0: i32) -> (i32, i32) {
    %c0_i32 = arith.constant 0 : i32
    %c0_i32_0 = arith.constant 0 : i32
    %c0_i32_1 = arith.constant 0 : i32
    return %c0_i32, %c0_i32_0 : i32, i32
  }
  func.func @transform_2(%arg0: i32) -> (i32, i32) {
    %c0_i32 = arith.constant 0 : i32
    %c0_i32_0 = arith.constant 0 : i32
    return %arg0, %c0_i32 : i32, i32
  }
  func.func @transform_3(%arg0: i32) -> (i32, i32) {
    %c0_i32 = arith.constant 0 : i32
    %c0_i32_0 = arith.constant 0 : i32
    %c0_i32_1 = arith.constant 0 : i32
    return %c0_i32, %c0_i32_0 : i32, i32
  }
}

</mosaic_0001>

<llo_original>
// kernel: attn_general.1
$region0: #{attn_general.1}
  #allocation0 [shape = 'u32[]', space=smem, size = 0x4, offset = 0x4, fixed_abs, tag = 'smem constant byte address 0x4 - core index']
  #allocation1 [shape = 'u32[144,128]{1,0:T(1,128)}', space=vmem, size = 0x12000, scoped, tag = 'internal scratch']
  %s0 = inlined_call_operand.vmem [shape: f32[64,2], index: 0, kind: input, shape index: {}]
  %s1 = inlined_call_operand.vmem [shape: f32[1,2], index: 1, kind: input, shape index: {}]
  %s2 = inlined_call_operand.vmem [shape: f32[8,64], index: 2, kind: input, shape index: {}]
  %s3 = inlined_call_operand.vmem [shape: f32[8,2], index: 3, kind: output, shape index: {}]
  %s4 = sld [smem:[#allocation0]]
  $region26: #{attn_general.1} parent=0
    _
  %s6 = ssub.s32 1, %s4
  %s7 = scalar_select 0, %s6, %s4
  // Predicated region
  $region2: #{attn_general.1} parent=0 // pred_check
    _
  $region3: #{attn_general.1} parent=0 // pred_check_branch
    %9 = sbr.rel (0) target = $region5
  $region4: #{attn_general.1} parent=0 // pred_region
    _
  $region5: #{attn_general.1} parent=0 // pred_fallthru
    _
  // Predicated region
  $region6: #{attn_general.1} parent=0 // pred_check
    _
  $region7: #{attn_general.1} parent=0 // pred_check_branch
    %11 = sbr.rel (0) target = $region9
  $region8: #{attn_general.1} parent=0 // pred_region
    _
  $region9: #{attn_general.1} parent=0 // pred_fallthru
    _
  // Predicated region
  $region10: #{attn_general.1} parent=0 // pred_check
    _
  $region11: #{attn_general.1} parent=0 // pred_check_branch
    %13 = sbr.rel (0) target = $region13
  $region12: #{attn_general.1} parent=0 // pred_region
    _
  $region13: #{attn_general.1} parent=0 // pred_fallthru
    _
  %v14 = vld [vmem:[%s2] sm:$0xff]
  %v15 = vld [vmem:[%s0] sm:$0xff]
  %v16 = vld [vmem:[%s0 + $0x8] sm:$0xff]
  %v17 = vld [vmem:[%s0 + $0x10] sm:$0xff]
  %v18 = vld [vmem:[%s0 + $0x18] sm:$0xff]
  %v19 = vld [vmem:[%s0 + $0x20] sm:$0xff]
  %v20 = vld [vmem:[%s0 + $0x28] sm:$0xff]
  %v21 = vld [vmem:[%s0 + $0x30] sm:$0xff]
  %v22 = vld [vmem:[%s0 + $0x38] sm:$0xff]
  %v23 = vld [vmem:[%s1] sm:$0x1]
  %v25 = vlaneseq
  %v26 = vshrl.u32 %v25, 7
  %v27 = vsub.s32 0, %v26
  %v28 = vrot.slane %v23, %v27
  %vm30 = vcmask 523264
  %v32 = vsel %vm30, %v14, 0
  %34 = vmatprep.subr.mxu0 0.0
  %35 = vmatpush1.msra.mxu0 %v15
  %36 = vmatprep.subr.mxu0 0.0
  %37 = vmatpush1.msra.mxu0 %v16
  %38 = vmatprep.subr.mxu0 0.0
  %39 = vmatpush1.msra.mxu0 %v17
  %40 = vmatprep.subr.mxu0 0.0
  %41 = vmatpush1.msra.mxu0 %v18
  %42 = vmatprep.subr.mxu0 0.0
  %43 = vmatpush1.msra.mxu0 %v19
  %44 = vmatprep.subr.mxu0 0.0
  %45 = vmatpush1.msra.mxu0 %v20
  %46 = vmatprep.subr.mxu0 0.0
  %47 = vmatpush1.msra.mxu0 %v21
  %48 = vmatprep.subr.mxu0 0.0
  %49 = vmatpush1.msra.mxu0 %v22
  %50 = vmatprep.subr.mxu0 0.0
  %51 = vmatpush1.msra.mxu0 0.0
  %52 = vmatprep.subr.mxu0 0.0
  %53 = vmatpush1.msra.mxu0 0.0
  %54 = vmatprep.subr.mxu0 0.0
  %55 = vmatpush1.msra.mxu0 0.0
  %56 = vmatprep.subr.mxu0 0.0
  %57 = vmatpush1.msra.mxu0 0.0
  %58 = vmatprep.subr.mxu0 0.0
  %59 = vmatpush1.msra.mxu0 0.0
  %60 = vmatprep.subr.mxu0 0.0
  %61 = vmatpush1.msra.mxu0 0.0
  %62 = vmatprep.subr.mxu0 0.0
  %63 = vmatpush1.msra.mxu0 0.0
  %64 = vmatprep.subr.mxu0 0.0
  %65 = vmatpush1.msra.mxu0 0.0
  %66 = vmatprep.subr.mxu0 0.0
  %67 = vmatpush1.msra.mxu0 0.0
  %68 = vmatprep.subr.mxu0 0.0
  %69 = vmatpush1.msra.mxu0 0.0
  %70 = vmatprep.subr.mxu0 0.0
  %71 = vmatpush1.msra.mxu0 0.0
  %72 = vmatprep.subr.mxu0 0.0
  %73 = vmatpush1.msra.mxu0 0.0
  %74 = vmatprep.subr.mxu0 0.0
  %75 = vmatpush1.msra.mxu0 0.0
  %76 = vmatprep.subr.mxu0 0.0
  %77 = vmatpush1.msra.mxu0 0.0
  %78 = vmatprep.subr.mxu0 0.0
  %79 = vmatpush1.msra.mxu0 0.0
  %80 = vmatprep.subr.mxu0 0.0
  %81 = vmatpush1.msra.mxu0 0.0
  %82 = vmatprep.subr.mxu0 0.0
  %83 = vmatpush1.msra.mxu0 0.0
  %84 = vmatprep.subr.mxu0 0.0
  %85 = vmatpush1.msra.mxu0 0.0
  %86 = vmatprep.subr.mxu0 0.0
  %87 = vmatpush1.msra.mxu0 0.0
  %88 = vmatprep.subr.mxu0 0.0
  %89 = vmatpush1.msra.mxu0 0.0
  %90 = vmatprep.subr.mxu0 0.0
  %91 = vmatpush1.msra.mxu0 0.0
  %92 = vmatprep.subr.mxu0 0.0
  %93 = vmatpush1.msra.mxu0 0.0
  %94 = vmatprep.subr.mxu0 0.0
  %95 = vmatpush1.msra.mxu0 0.0
  %96 = vmatprep.subr.mxu0 0.0
  %97 = vmatpush1.msra.mxu0 0.0
  %98 = vmatprep.mubr.f32.mxu0 0.0
  %99 = vmatmul.mubr.f32.gmra.mrb[0].mxu0 %v32
  %v100 = vpop.f32.mrb[0].mxu0
  %v101 = vadd.f32 %v28, %v100
  %v102 = vpop.f32.mrb[0].mxu0
  %103 = vdwg.mxu0
  %s104 = smul.u32 0, 8
  %s105 = scalar_lea.vmem %s3, %s104
  %vm106 = vcmask 15360
  %107 = vst.msk [vmem:[%s105] sm:$0xff] %vm106, %v101
  %p108 = scmp.eq.s32.totalorder 0, 0
  // Predicated region
  $region14: #{attn_general.1} parent=0 // pred_check
    %p109 = pneg %p108
  $region15: #{attn_general.1} parent=0 // pred_check_branch
    %111 = sbr.rel (%p109) target = $region17
  $region16: #{attn_general.1} parent=0 // pred_region
    %v112 = vld [vmem:[%s3] sm:$0xff]
    %v113 = vsel %vm106, %v112, -inf
    %v114 = vrot.slane %v113, 4
    %v115 = vmax.f32 %v113, %v114
    %v116 = vrot.slane %v115, 2
    %v117 = vmax.f32 %v115, %v116
    %v118 = vrot.slane %v117, 1
    %v119 = vmax.f32 %v117, %v118
    %v120 = vsub.f32 %v112, %v119
    %v121 = vmul.f32 %v120, 1.442695
    %v122 = vpow.pop %v121
    %v123 = vsel %vm106, %v122, 0.0
    %v124 = vrot.slane %v123, 4
    %v125 = vadd.f32 %v123, %v124
    %v126 = vrot.slane %v125, 2
    %v127 = vadd.f32 %v125, %v126
    %v128 = vrot.slane %v127, 1
    %v129 = vadd.f32 %v127, %v128
    %v130 = vrcp.pop %v129
    %v131 = vmul.f32 %v122, %v130
    %132 = vst.msk [vmem:[%s3] sm:$0xff] %vm106, %v131
  $region17: #{attn_general.1} parent=0 // pred_fallthru
    _
  // Predicated region
  $region18: #{attn_general.1} parent=0 // pred_check
    _
  $region19: #{attn_general.1} parent=0 // pred_check_branch
    %134 = sbr.rel (0) target = $region21
  $region20: #{attn_general.1} parent=0 // pred_region
    _
  $region21: #{attn_general.1} parent=0 // pred_fallthru
    _
  // Predicated region
  $region22: #{attn_general.1} parent=0 // pred_check
    _
  $region23: #{attn_general.1} parent=0 // pred_check_branch
    %136 = sbr.rel (0) target = $region25
  $region24: #{attn_general.1} parent=0 // pred_region
    _
  $region25: #{attn_general.1} parent=0 // pred_fallthru
    _

</llo_original>
